<compile_context>
chip_gen: v5e
topology: v5e:2x2
jax: 0.10.0
libtpu: 0.0.40
codegen_flags: <defaults>
</compile_context>

<pallas_src>
import jax
import jax.numpy as jnp
from jax.experimental import pallas as pl
from jax.experimental.pallas import tpu as pltpu


def graph_learner_kernel(x_ref, w1_ref, b1_ref, w2_ref, b2_ref, out_ref):
    """One grid step processes a block of `Bb` batch elements.

    x_ref   : (Bb, T, N, D)  VMEM
    w1_ref  : (D, H)         VMEM (constant index_map -> stays resident)
    b1_ref  : (1, H)
    w2_ref  : (H, H)
    b2_ref  : (1, H)
    out_ref : (Bb, N, N)
    """
    Bb, T, N, D = x_ref.shape
    H = w1_ref.shape[1]

    # Mean over the time axis (leading-axis reduction -> cheap vreg adds).
    # TODO(synk): for production-scale T, stream T via an extra "arbitrary"
    # grid axis + (Bb*N, D) VMEM accumulator (finalize under pl.when on the
    # last T-step) and view the trailing (N, D) as 128-lane-dense rows so the
    # time-sum runs on full vregs; set vmem_limit_bytes accordingly (v7x has
    # only 64 MiB physical VMEM).
    x_mean = jnp.mean(x_ref[...], axis=1)                        # (Bb, N, D)

    # Fold (Bb, N) into the matmul row dim so the shared-weight linears run
    # as a single (Bb*N)-row MXU op.  (Leading-dim reshapes only; the lane
    # dim is untouched, so these are layout no-ops for N a multiple of 8.)
    xm = x_mean.reshape(Bb * N, D)
    h = jnp.dot(xm, w1_ref[...], preferred_element_type=jnp.float32) + b1_ref[...]
    h = jnp.maximum(h, 0.0)                                      # (Bb*N, H)
    h = jnp.dot(h, w2_ref[...], preferred_element_type=jnp.float32) + b2_ref[...]

    # Per-batch gram matrix h @ h^T as a batched contraction over the last
    # dim of both operands (no explicit transpose in the kernel source).
    h3 = h.reshape(Bb, N, H)
    adj = jnp.einsum("bnh,bmh->bnm", h3, h3,
                     preferred_element_type=jnp.float32)         # (Bb, N, N)
    adj = jnp.maximum(adj, 0.0)

    # Row-normalise.  EUP approx reciprocal + one Newton-Raphson refinement:
    # relative error ~2^-24, well inside the 1e-5 tolerance, and the divide
    # stays off the VPU slot.
    adj_sum = jnp.sum(adj, axis=-1, keepdims=True) + 1e-6        # (Bb, N, 1)
    r = pl.reciprocal(adj_sum, approx=True)
    r = r * (2.0 - adj_sum * r)

    # Single dense writeback of the whole block.
    out_ref[...] = adj * r


def _pick_batch_block(B, T, N, D, vmem_budget_bytes=32 << 20):
    """Batch elements per grid step.

    The grid is a sequential loop on single-TC chips (v5e/v6e), and on v7x the
    ~0.35 us per-step overhead only pays off once each step has ~256 folded
    MXU rows.  So: keep everything in one grid step unless B*N >= 512 (each of
    the resulting steps then still carries >= 256 rows), and additionally cap
    Bb so the double-buffered x tile stays within a conservative VMEM budget.
    """
    rows_per_batch = max(N, 1)
    bytes_per_batch = 2 * T * N * D * 4          # double-buffered f32 x tile
    vmem_cap = max(1, vmem_budget_bytes // max(bytes_per_batch, 1))
    if B * rows_per_batch < 512 and B <= vmem_cap:
        return B                                 # one grid step, no splitting
    target = max(1, 256 // rows_per_batch)       # ~256 folded MXU rows / step
    return max(1, min(B, target, vmem_cap))


def graph_learner(x, w1, b1, w2, b2):
    """x: (B, T, N, D) float32; returns (B, N, N) float32 row-normalised adjacency."""
    B, T, N, D = x.shape
    H = w1.shape[1]

    Bb = _pick_batch_block(B, T, N, D)
    n_blocks = pl.cdiv(B, Bb)
    B_pad = n_blocks * Bb
    if B_pad != B:
        # Pad awkward batch sizes up to a multiple of Bb instead of degrading
        # to Bb=1 (B tiny grid steps of pure overhead); padded rows are junk
        # and sliced off below.
        x = jnp.pad(x, ((0, B_pad - B), (0, 0), (0, 0), (0, 0)))

    out = pl.pallas_call(
        graph_learner_kernel,
        out_shape=jax.ShapeDtypeStruct((B_pad, N, N), jnp.float32),
        grid_spec=pltpu.PrefetchScalarGridSpec(
            num_scalar_prefetch=0,
            grid=(n_blocks,),
            in_specs=[
                pl.BlockSpec((Bb, T, N, D), lambda b: (b, 0, 0, 0)),
                pl.BlockSpec((D, H), lambda b: (0, 0)),
                pl.BlockSpec((1, H), lambda b: (0, 0)),
                pl.BlockSpec((H, H), lambda b: (0, 0)),
                pl.BlockSpec((1, H), lambda b: (0, 0)),
            ],
            out_specs=pl.BlockSpec((Bb, N, N), lambda b: (b, 0, 0)),
        ),
        compiler_params=pltpu.CompilerParams(
            dimension_semantics=("parallel",)),
    )(x, w1, b1, w2, b2)

    return out[:B] if B_pad != B else out


def graph_learner_ref(x, w1, b1, w2, b2):
    """Pure-JAX reference mirroring the PyTorch forward."""
    x_mean = x.mean(axis=1)                              # (B, N, D)
    h = jax.nn.relu(x_mean @ w1 + b1)                    # (B, N, H)
    h = h @ w2 + b2                                      # (B, N, H)
    adj = jax.nn.relu(jnp.einsum("bnh,bmh->bnm", h, h))  # (B, N, N)
    adj_sum = adj.sum(axis=-1, keepdims=True) + 1e-6
    return adj / adj_sum


def _make_inputs(key, B, T, N, D, H):
    kx, kw1, kb1, kw2, kb2 = jax.random.split(key, 5)
    x = jax.random.normal(kx, (B, T, N, D), dtype=jnp.float32)
    # PyTorch Linear stores (out, in); we store transposed (in, out) for x @ W.
    w1 = jax.random.normal(kw1, (D, H), dtype=jnp.float32) * (1.0 / jnp.sqrt(D))
    b1 = jax.random.normal(kb1, (1, H), dtype=jnp.float32) * 0.01
    w2 = jax.random.normal(kw2, (H, H), dtype=jnp.float32) * (1.0 / jnp.sqrt(H))
    b2 = jax.random.normal(kb2, (1, H), dtype=jnp.float32) * 0.01
    return x, w1, b1, w2, b2


if __name__ == "__main__":
    # Small shapes consistent with the module's forward: Bb = B = 2, grid=(1,).
    B, T, N, D, H = 2, 8, 16, 32, 64
    args = _make_inputs(jax.random.PRNGKey(0), B, T, N, D, H)
    out = jax.block_until_ready(graph_learner(*args))
    ref = graph_learner_ref(*args)
    assert out.shape == (B, N, N)
    assert jnp.allclose(out, ref, atol=1e-5, rtol=1e-4), "mismatch vs reference (B=2)"

    # Larger batch exercises the folded-row path (Bb = 8, single grid step).
    B2 = 8
    args2 = _make_inputs(jax.random.PRNGKey(1), B2, T, N, D, H)
    out2 = jax.block_until_ready(graph_learner(*args2))
    ref2 = graph_learner_ref(*args2)
    assert out2.shape == (B2, N, N)
    assert jnp.allclose(out2, ref2, atol=1e-5, rtol=1e-4), "mismatch vs reference (B=8)"

    print("KERNEL_OK")
</pallas_src>

<mosaic_0001>
module attributes {stable_mosaic.version = 11 : i64} {
  func.func @graph_learner_kernel(%arg0: i32, %arg1: memref<2x8x16x32xf32, #tpu.memory_space<vmem>>, %arg2: memref<32x64xf32, #tpu.memory_space<vmem>>, %arg3: memref<1x64xf32, #tpu.memory_space<vmem>>, %arg4: memref<64x64xf32, #tpu.memory_space<vmem>>, %arg5: memref<1x64xf32, #tpu.memory_space<vmem>>, %arg6: memref<2x16x16xf32, #tpu.memory_space<vmem>>) attributes {dimension_semantics = [#tpu.dimension_semantics<parallel>], iteration_bounds = array<i64: 1>, scalar_prefetch = 0 : i64, scratch_operands = 0 : i64, tpu.core_type = #tpu.core_type<tc>, window_params = [{transform_indices = @transform_0, window_bounds = array<i64: 2, 8, 16, 32>}, {pipeline_mode = #tpu.pipeline_mode<synchronous>, transform_indices = @transform_1, window_bounds = array<i64: 32, 64>}, {pipeline_mode = #tpu.pipeline_mode<synchronous>, transform_indices = @transform_2, window_bounds = array<i64: 1, 64>}, {pipeline_mode = #tpu.pipeline_mode<synchronous>, transform_indices = @transform_3, window_bounds = array<i64: 64, 64>}, {pipeline_mode = #tpu.pipeline_mode<synchronous>, transform_indices = @transform_4, window_bounds = array<i64: 1, 64>}, {transform_indices = @transform_5, window_bounds = array<i64: 2, 16, 16>}]} {
    %c0 = arith.constant 0 : index
    %c0_0 = arith.constant 0 : index
    %c0_1 = arith.constant 0 : index
    %c0_2 = arith.constant 0 : index
    %0 = vector.load %arg1[%c0, %c0_0, %c0_1, %c0_2] : memref<2x8x16x32xf32, #tpu.memory_space<vmem>>, vector<2x8x16x32xf32>
    %cst = arith.constant dense<0.000000e+00> : vector<2x16x32xf32>
    %1 = vector.multi_reduction <add>, %0, %cst [1] : vector<2x8x16x32xf32> to vector<2x16x32xf32>
    %cst_3 = arith.constant 8.000000e+00 : f32
    %2 = vector.broadcast %cst_3 : f32 to vector<2x16x32xf32>
    %3 = arith.divf %1, %2 : vector<2x16x32xf32>
    %4 = vector.shape_cast %3 : vector<2x16x32xf32> to vector<32x32xf32>
    %c0_4 = arith.constant 0 : index
    %c0_5 = arith.constant 0 : index
    %5 = vector.load %arg2[%c0_4, %c0_5] : memref<32x64xf32, #tpu.memory_space<vmem>>, vector<32x64xf32>
    %cst_6 = arith.constant dense<0.000000e+00> : vector<32x64xf32>
    %6 = tpu.matmul %4, %5, %cst_6 {dimension_numbers = #tpu.dot_dimension_numbers<[1], [0], [0], [1], [0, 0, 1, 1], [], []>} : vector<32x32xf32>, vector<32x64xf32>, vector<32x64xf32> -> vector<32x64xf32>
    %c0_7 = arith.constant 0 : index
    %c0_8 = arith.constant 0 : index
    %7 = vector.load %arg3[%c0_7, %c0_8] : memref<1x64xf32, #tpu.memory_space<vmem>>, vector<1x64xf32>
    %8 = vector.broadcast %7 : vector<1x64xf32> to vector<32x64xf32>
    %9 = arith.addf %6, %8 : vector<32x64xf32>
    %cst_9 = arith.constant 0.000000e+00 : f32
    %10 = vector.broadcast %cst_9 : f32 to vector<32x64xf32>
    %11 = arith.maximumf %9, %10 : vector<32x64xf32>
    %c0_10 = arith.constant 0 : index
    %c0_11 = arith.constant 0 : index
    %12 = vector.load %arg4[%c0_10, %c0_11] : memref<64x64xf32, #tpu.memory_space<vmem>>, vector<64x64xf32>
    %cst_12 = arith.constant dense<0.000000e+00> : vector<32x64xf32>
    %13 = tpu.matmul %11, %12, %cst_12 {dimension_numbers = #tpu.dot_dimension_numbers<[1], [0], [0], [1], [0, 0, 1, 1], [], []>} : vector<32x64xf32>, vector<64x64xf32>, vector<32x64xf32> -> vector<32x64xf32>
    %c0_13 = arith.constant 0 : index
    %c0_14 = arith.constant 0 : index
    %14 = vector.load %arg5[%c0_13, %c0_14] : memref<1x64xf32, #tpu.memory_space<vmem>>, vector<1x64xf32>
    %15 = vector.broadcast %14 : vector<1x64xf32> to vector<32x64xf32>
    %16 = arith.addf %13, %15 : vector<32x64xf32>
    %17 = vector.shape_cast %16 : vector<32x64xf32> to vector<2x16x64xf32>
    "tpu.trace_start"() <{level = 10 : i32, message = "bnh,bmh->bnm"}> : () -> ()
    %cst_15 = arith.constant dense<0.000000e+00> : vector<2x16x16xf32>
    %18 = tpu.matmul %17, %17, %cst_15 {dimension_numbers = #tpu.dot_dimension_numbers<[2], [2], [1], [1], [0, 0, 0, 1, 1, 1], [0], [0]>} : vector<2x16x64xf32>, vector<2x16x64xf32>, vector<2x16x16xf32> -> vector<2x16x16xf32>
    "tpu.trace_stop"() : () -> ()
    %cst_16 = arith.constant 0.000000e+00 : f32
    %19 = vector.broadcast %cst_16 : f32 to vector<2x16x16xf32>
    %20 = arith.maximumf %18, %19 : vector<2x16x16xf32>
    %cst_17 = arith.constant dense<0.000000e+00> : vector<2x16xf32>
    %21 = vector.multi_reduction <add>, %20, %cst_17 [2] : vector<2x16x16xf32> to vector<2x16xf32>
    %22 = vector.shape_cast %21 : vector<2x16xf32> to vector<2x16x1xf32>
    %cst_18 = arith.constant 9.99999997E-7 : f32
    %23 = vector.broadcast %cst_18 : f32 to vector<2x16x1xf32>
    %24 = arith.addf %22, %23 : vector<2x16x1xf32>
    %25 = tpu.reciprocal %24 {approx = true} : vector<2x16x1xf32> -> vector<2x16x1xf32>
    %26 = arith.mulf %24, %25 : vector<2x16x1xf32>
    %cst_19 = arith.constant 2.000000e+00 : f32
    %27 = vector.broadcast %cst_19 : f32 to vector<2x16x1xf32>
    %28 = arith.subf %27, %26 : vector<2x16x1xf32>
    %29 = arith.mulf %25, %28 : vector<2x16x1xf32>
    %30 = vector.broadcast %29 : vector<2x16x1xf32> to vector<2x16x16xf32>
    %31 = arith.mulf %20, %30 : vector<2x16x16xf32>
    %c0_20 = arith.constant 0 : index
    %c0_21 = arith.constant 0 : index
    %c0_22 = arith.constant 0 : index
    %32 = vector.load %arg6[%c0_20, %c0_21, %c0_22] : memref<2x16x16xf32, #tpu.memory_space<vmem>>, vector<2x16x16xf32>
    tpu.vector_store %arg6[%c0_20, %c0_21, %c0_22], %31 {strides = array<i32>} : memref<2x16x16xf32, #tpu.memory_space<vmem>>, vector<2x16x16xf32>,
    return
  }
  func.func @transform_0(%arg0: i32) -> (i32, i32, i32, i32) {
    %c0_i32 = arith.constant 0 : i32
    %c0_i32_0 = arith.constant 0 : i32
    %c0_i32_1 = arith.constant 0 : i32
    %c0_i32_2 = arith.constant 0 : i32
    return %arg0, %c0_i32, %c0_i32_0, %c0_i32_1 : i32, i32, i32, i32
  }
  func.func @transform_1(%arg0: i32) -> (i32, i32) {
    %c0_i32 = arith.constant 0 : i32
    %c0_i32_0 = arith.constant 0 : i32
    %c0_i32_1 = arith.constant 0 : i32
    return %c0_i32, %c0_i32_0 : i32, i32
  }
  func.func @transform_2(%arg0: i32) -> (i32, i32) {
    %c0_i32 = arith.constant 0 : i32
    %c0_i32_0 = arith.constant 0 : i32
    %c0_i32_1 = arith.constant 0 : i32
    return %c0_i32, %c0_i32_0 : i32, i32
  }
  func.func @transform_3(%arg0: i32) -> (i32, i32) {
    %c0_i32 = arith.constant 0 : i32
    %c0_i32_0 = arith.constant 0 : i32
    %c0_i32_1 = arith.constant 0 : i32
    return %c0_i32, %c0_i32_0 : i32, i32
  }
  func.func @transform_4(%arg0: i32) -> (i32, i32) {
    %c0_i32 = arith.constant 0 : i32
    %c0_i32_0 = arith.constant 0 : i32
    %c0_i32_1 = arith.constant 0 : i32
    return %c0_i32, %c0_i32_0 : i32, i32
  }
  func.func @transform_5(%arg0: i32) -> (i32, i32, i32) {
    %c0_i32 = arith.constant 0 : i32
    %c0_i32_0 = arith.constant 0 : i32
    %c0_i32_1 = arith.constant 0 : i32
    return %arg0, %c0_i32, %c0_i32_0 : i32, i32, i32
  }
}

</mosaic_0001>

<llo_original>
// kernel: tpu_custom_call.1
$region0: #{tpu_custom_call.1}
  #allocation0 [shape = 'u32[]', space=smem, size = 0x4, offset = 0x4, fixed_abs, tag = 'smem constant byte address 0x4 - core index']
  #allocation1 [shape = 'u32[72,128]{1,0:T(1,128)}', space=vmem, size = 0x9000, scoped, tag = 'internal scratch']
  %s0 = inlined_call_operand.hbm [shape: f32[2,8,16,32], index: 0, kind: input, shape index: {}]
  %s1 = inlined_call_operand.hbm [shape: f32[32,64], index: 1, kind: input, shape index: {}]
  %s2 = inlined_call_operand.vmem [shape: f32[1,64], index: 2, kind: input, shape index: {}]
  %s3 = inlined_call_operand.hbm [shape: f32[64,64], index: 3, kind: input, shape index: {}]
  %s4 = inlined_call_operand.vmem [shape: f32[1,64], index: 4, kind: input, shape index: {}]
  %s5 = inlined_call_operand.hbm [shape: f32[2,16,16], index: 5, kind: output, shape index: {}]
  %s6 = sld [smem:[#allocation0]]
  $region42: #{tpu_custom_call.1} parent=0
    _
  %s8 = ssub.s32 1, %s6
  %s9 = scalar_select 0, %s8, %s6
  $region1: #{tpu_custom_call.1} parent=0
    #allocation2 [shape = 'u8[131072]{0}', space=vmem, size = 0x20000, scoped, tag = 'input window, operand 0, single buffered']
    #allocation3 [shape = 's32[1]{0}', space=sflag, size = 0x4, scoped, tag = 'scoped memory for tpu_custom_call.1']
    #allocation4 [shape = 's32[1]{0}', space=sflag, size = 0x4, scoped, tag = 'scoped memory for tpu_custom_call.1']
    #allocation5 [shape = 'u8[16384]{0}', space=vmem, size = 0x4000, scoped, tag = 'input window, operand 1, single buffered']
    #allocation6 [shape = 's32[1]{0}', space=sflag, size = 0x4, scoped, tag = 'scoped memory for tpu_custom_call.1']
    #allocation7 [shape = 'u8[32768]{0}', space=vmem, size = 0x8000, scoped, tag = 'input window, operand 3, single buffered']
    #allocation8 [shape = 'u8[16384]{0}', space=vmem, size = 0x4000, scoped, tag = 'output window, operand 0, single buffered']
    %10 = vsyncpa [#allocation3], 0
    %11 = vsyncpa [#allocation6], 0
    %12 = vsyncpa [#allocation4], 0
    // Predicated region
    $region2: #{tpu_custom_call.1} parent=1 // pred_check
      _
    $region3: #{tpu_custom_call.1} parent=1 // pred_check_branch
      %14 = sbr.rel (0) target = $region5
    $region4: #{tpu_custom_call.1} parent=1 // pred_region
      %16 = vsyncadd [#allocation3], 0
      %s17 = sshll.u32 %s0, 4
      %s18 = int_to_ptr.hbm [resolvable:$true] %s17
      %s19 = sshll.u32 [#allocation2], 4
      %s20 = int_to_ptr.vmem [resolvable:$true] %s19
      %25 = dma.hbm_to_vmem [thread:$0]  %s18, 4096, %s20, [#allocation3], 128, 128, 8
    $region5: #{tpu_custom_call.1} parent=1 // pred_fallthru
      _
    // Predicated region
    $region6: #{tpu_custom_call.1} parent=1 // pred_check
      _
    $region7: #{tpu_custom_call.1} parent=1 // pred_check_branch
      %27 = sbr.rel (0) target = $region9
    $region8: #{tpu_custom_call.1} parent=1 // pred_region
      %29 = vsyncadd [#allocation6], 0
      %s30 = sshll.u32 %s1, 4
      %s31 = int_to_ptr.hbm [resolvable:$true] %s30
      %s32 = sshll.u32 [#allocation5], 4
      %s33 = int_to_ptr.vmem [resolvable:$true] %s32
      %38 = dma.hbm_to_vmem [thread:$0]  %s31, 512, %s33, [#allocation6], 128, 128, 8
    $region9: #{tpu_custom_call.1} parent=1 // pred_fallthru
      _
    // Predicated region
    $region10: #{tpu_custom_call.1} parent=1 // pred_check
      _
    $region11: #{tpu_custom_call.1} parent=1 // pred_check_branch
      %40 = sbr.rel (0) target = $region13
    $region12: #{tpu_custom_call.1} parent=1 // pred_region
      _
    $region13: #{tpu_custom_call.1} parent=1 // pred_fallthru
      _
    // Predicated region
    $region14: #{tpu_custom_call.1} parent=1 // pred_check
      _
    $region15: #{tpu_custom_call.1} parent=1 // pred_check_branch
      %42 = sbr.rel (0) target = $region17
    $region16: #{tpu_custom_call.1} parent=1 // pred_region
      %44 = vsyncadd [#allocation6], 0
      %s45 = sshll.u32 %s3, 4
      %s46 = int_to_ptr.hbm [resolvable:$true] %s45
      %s47 = sshll.u32 [#allocation7], 4
      %s48 = int_to_ptr.vmem [resolvable:$true] %s47
      %53 = dma.hbm_to_vmem [thread:$0]  %s46, 1024, %s48, [#allocation6], 128, 128, 8
    $region17: #{tpu_custom_call.1} parent=1 // pred_fallthru
      _
    // Predicated region
    $region18: #{tpu_custom_call.1} parent=1 // pred_check
      _
    $region19: #{tpu_custom_call.1} parent=1 // pred_check_branch
      %55 = sbr.rel (0) target = $region21
    $region20: #{tpu_custom_call.1} parent=1 // pred_region
      _
    $region21: #{tpu_custom_call.1} parent=1 // pred_fallthru
      _
    // Predicated region
    $region22: #{tpu_custom_call.1} parent=1 // pred_check
      _
    $region23: #{tpu_custom_call.1} parent=1 // pred_check_branch
      %57 = sbr.rel (0) target = $region25
    $region24: #{tpu_custom_call.1} parent=1 // pred_region
      %59 = dma.done [#allocation3], 4096
    $region25: #{tpu_custom_call.1} parent=1 // pred_fallthru
      _
    // Predicated region
    $region26: #{tpu_custom_call.1} parent=1 // pred_check
      _
    $region27: #{tpu_custom_call.1} parent=1 // pred_check_branch
      %61 = sbr.rel (0) target = $region29
    $region28: #{tpu_custom_call.1} parent=1 // pred_region
      %63 = dma.done [#allocation6], 512
    $region29: #{tpu_custom_call.1} parent=1 // pred_fallthru
      _
    // Predicated region
    $region30: #{tpu_custom_call.1} parent=1 // pred_check
      _
    $region31: #{tpu_custom_call.1} parent=1 // pred_check_branch
      %65 = sbr.rel (0) target = $region33
    $region32: #{tpu_custom_call.1} parent=1 // pred_region
      %67 = dma.done [#allocation6], 1024
    $region33: #{tpu_custom_call.1} parent=1 // pred_fallthru
      _
    %v68 = vld [vmem:[#allocation2] sm:$0xff]
    %v69 = vld [vmem:[#allocation2 + $0x8] sm:$0xff]
    %v70 = vld [vmem:[#allocation2 + $0x10] sm:$0xff]
    %v71 = vld [vmem:[#allocation2 + $0x18] sm:$0xff]
    %v72 = vld [vmem:[#allocation2 + $0x20] sm:$0xff]
    %v73 = vld [vmem:[#allocation2 + $0x28] sm:$0xff]
    %v74 = vld [vmem:[#allocation2 + $0x30] sm:$0xff]
    %v75 = vld [vmem:[#allocation2 + $0x38] sm:$0xff]
    %v76 = vld [vmem:[#allocation2 + $0x40] sm:$0xff]
    %v77 = vld [vmem:[#allocation2 + $0x48] sm:$0xff]
    %v78 = vld [vmem:[#allocation2 + $0x50] sm:$0xff]
    %v79 = vld [vmem:[#allocation2 + $0x58] sm:$0xff]
    %v80 = vld [vmem:[#allocation2 + $0x60] sm:$0xff]
    %v81 = vld [vmem:[#allocation2 + $0x68] sm:$0xff]
    %v82 = vld [vmem:[#allocation2 + $0x70] sm:$0xff]
    %v83 = vld [vmem:[#allocation2 + $0x78] sm:$0xff]
    %v84 = vld [vmem:[#allocation2 + $0x80] sm:$0xff]
    %v85 = vld [vmem:[#allocation2 + $0x88] sm:$0xff]
    %v86 = vld [vmem:[#allocation2 + $0x90] sm:$0xff]
    %v87 = vld [vmem:[#allocation2 + $0x98] sm:$0xff]
    %v88 = vld [vmem:[#allocation2 + $0xa0] sm:$0xff]
    %v89 = vld [vmem:[#allocation2 + $0xa8] sm:$0xff]
    %v90 = vld [vmem:[#allocation2 + $0xb0] sm:$0xff]
    %v91 = vld [vmem:[#allocation2 + $0xb8] sm:$0xff]
    %v92 = vld [vmem:[#allocation2 + $0xc0] sm:$0xff]
    %v93 = vld [vmem:[#allocation2 + $0xc8] sm:$0xff]
    %v94 = vld [vmem:[#allocation2 + $0xd0] sm:$0xff]
    %v95 = vld [vmem:[#allocation2 + $0xd8] sm:$0xff]
    %v96 = vld [vmem:[#allocation2 + $0xe0] sm:$0xff]
    %v97 = vld [vmem:[#allocation2 + $0xe8] sm:$0xff]
    %v98 = vld [vmem:[#allocation2 + $0xf0] sm:$0xff]
    %v99 = vld [vmem:[#allocation2 + $0xf8] sm:$0xff]
    %vm100 = vcmask 261120
    %v101 = vsel %vm100, %v68, 0.0
    %v102 = vsel %vm100, %v70, 0.0
    %v103 = vadd.f32 %v101, %v102
    %v104 = vsel %vm100, %v72, 0.0
    %v105 = vadd.f32 %v103, %v104
    %v106 = vsel %vm100, %v74, 0.0
    %v107 = vadd.f32 %v105, %v106
    %v108 = vsel %vm100, %v76, 0.0
    %v109 = vadd.f32 %v107, %v108
    %v110 = vsel %vm100, %v78, 0.0
    %v111 = vadd.f32 %v109, %v110
    %v112 = vsel %vm100, %v80, 0.0
    %v113 = vadd.f32 %v111, %v112
    %v114 = vsel %vm100, %v82, 0.0
    %v115 = vadd.f32 %v113, %v114
    %v116 = vsel %vm100, %v69, 0.0
    %v117 = vsel %vm100, %v71, 0.0
    %v118 = vadd.f32 %v116, %v117
    %v119 = vsel %vm100, %v73, 0.0
    %v120 = vadd.f32 %v118, %v119
    %v121 = vsel %vm100, %v75, 0.0
    %v122 = vadd.f32 %v120, %v121
    %v123 = vsel %vm100, %v77, 0.0
    %v124 = vadd.f32 %v122, %v123
    %v125 = vsel %vm100, %v79, 0.0
    %v126 = vadd.f32 %v124, %v125
    %v127 = vsel %vm100, %v81, 0.0
    %v128 = vadd.f32 %v126, %v127
    %v129 = vsel %vm100, %v83, 0.0
    %v130 = vadd.f32 %v128, %v129
    %v131 = vsel %vm100, %v84, 0.0
    %v132 = vsel %vm100, %v86, 0.0
    %v133 = vadd.f32 %v131, %v132
    %v134 = vsel %vm100, %v88, 0.0
    %v135 = vadd.f32 %v133, %v134
    %v136 = vsel %vm100, %v90, 0.0
    %v137 = vadd.f32 %v135, %v136
    %v138 = vsel %vm100, %v92, 0.0
    %v139 = vadd.f32 %v137, %v138
    %v140 = vsel %vm100, %v94, 0.0
    %v141 = vadd.f32 %v139, %v140
    %v142 = vsel %vm100, %v96, 0.0
    %v143 = vadd.f32 %v141, %v142
    %v144 = vsel %vm100, %v98, 0.0
    %v145 = vadd.f32 %v143, %v144
    %v146 = vsel %vm100, %v85, 0.0
    %v147 = vsel %vm100, %v87, 0.0
    %v148 = vadd.f32 %v146, %v147
    %v149 = vsel %vm100, %v89, 0.0
    %v150 = vadd.f32 %v148, %v149
    %v151 = vsel %vm100, %v91, 0.0
    %v152 = vadd.f32 %v150, %v151
    %v153 = vsel %vm100, %v93, 0.0
    %v154 = vadd.f32 %v152, %v153
    %v155 = vsel %vm100, %v95, 0.0
    %v156 = vadd.f32 %v154, %v155
    %v157 = vsel %vm100, %v97, 0.0
    %v158 = vadd.f32 %v156, %v157
    %v159 = vsel %vm100, %v99, 0.0
    %v160 = vadd.f32 %v158, %v159
    %v161 = vrcp.pop 8.0
    %v162 = vmul.f32 8.0, %v161
    %v163 = vsub.f32 1.0, %v162
    %v164 = vmul.f32 %v161, %v163
    %v165 = vadd.f32 %v161, %v164
    %vm166 = vweird.f32 %v161
    %v167 = vsel %vm166, %v161, %v165
    %v168 = vmul.f32 %v115, %v167
    %v169 = vmul.f32 %v130, %v167
    %v170 = vmul.f32 %v145, %v167
    %v171 = vmul.f32 %v160, %v167
    %v172 = vld [vmem:[#allocation5] sm:$0xff]
    %v173 = vld [vmem:[#allocation5 + $0x8] sm:$0xff]
    %v174 = vld [vmem:[#allocation5 + $0x10] sm:$0xff]
    %v175 = vld [vmem:[#allocation5 + $0x18] sm:$0xff]
    %v176 = vld [vmem:[%s2] sm:$0x1]
    %v178 = vperm.slane %v176, 0
    %v181 = vsel %vm100, %v168, 0
    %v184 = vsel %vm100, %v169, 0
    %v187 = vsel %vm100, %v170, 0
    %v190 = vsel %vm100, %v171, 0
    %192 = vmatpush.msra.mxu0 0.0
    %193 = vmatpush.msra.mxu0 0.0
    %194 = vmatpush.msra.mxu0 0.0
    %195 = vmatpush.msra.mxu0 0.0
    %196 = vmatpush.msra.mxu0 0.0
    %197 = vmatpush.msra.mxu0 0.0
    %198 = vmatpush.msra.mxu0 0.0
    %199 = vmatpush.msra.mxu0 0.0
    %200 = vmatpush.msra.mxu0 0.0
    %201 = vmatpush.msra.mxu0 0.0
    %202 = vmatpush.msra.mxu0 0.0
    %203 = vmatpush.msra.mxu0 0.0
    %204 = vmatpush.msra.mxu0 %v175
    %205 = vmatpush.msra.mxu0 %v174
    %206 = vmatpush.msra.mxu0 %v173
    %207 = vmatpush.msra.mxu0 %v172
    %208 = vmatmul.f32.gmra.mxu0 %v181
    %v209 = vpop.f32.mrf.mxu0
    %v210 = vadd.f32 %v178, %v209
    %211 = vmatmul.f32.gmra.mxu0 %v184
    %v212 = vpop.f32.mrf.mxu0
    %v213 = vadd.f32 %v178, %v212
    %214 = vmatmul.f32.gmra.mxu0 %v187
    %v215 = vpop.f32.mrf.mxu0
    %v216 = vadd.f32 %v178, %v215
    %217 = vmatmul.f32.gmra.mxu0 %v190
    %v218 = vpop.f32.mrf.mxu0
    %v219 = vadd.f32 %v178, %v218
    %220 = vdwg.mxu0
    %v221 = vmax.f32 %v210, 0.0
    %v222 = vmax.f32 %v213, 0.0
    %v223 = vmax.f32 %v216, 0.0
    %v224 = vmax.f32 %v219, 0.0
    %v225 = vld [vmem:[#allocation7] sm:$0xff]
    %v226 = vld [vmem:[#allocation7 + $0x8] sm:$0xff]
    %v227 = vld [vmem:[#allocation7 + $0x10] sm:$0xff]
    %v228 = vld [vmem:[#allocation7 + $0x18] sm:$0xff]
    %v229 = vld [vmem:[#allocation7 + $0x20] sm:$0xff]
    %v230 = vld [vmem:[#allocation7 + $0x28] sm:$0xff]
    %v231 = vld [vmem:[#allocation7 + $0x30] sm:$0xff]
    %v232 = vld [vmem:[#allocation7 + $0x38] sm:$0xff]
    %v233 = vld [vmem:[%s4] sm:$0x1]
    %v235 = vperm.slane %v233, 0
    %vm237 = vcmask 523264
    %v239 = vsel %vm237, %v221, 0
    %v242 = vsel %vm237, %v222, 0
    %v245 = vsel %vm237, %v223, 0
    %v248 = vsel %vm237, %v224, 0
    %250 = vmatpush.msra.mxu0 0.0
    %251 = vmatpush.msra.mxu0 0.0
    %252 = vmatpush.msra.mxu0 0.0
    %253 = vmatpush.msra.mxu0 0.0
    %254 = vmatpush.msra.mxu0 0.0
    %255 = vmatpush.msra.mxu0 0.0
    %256 = vmatpush.msra.mxu0 0.0
    %257 = vmatpush.msra.mxu0 0.0
    %258 = vmatpush.msra.mxu0 %v232
    %259 = vmatpush.msra.mxu0 %v231
    %260 = vmatpush.msra.mxu0 %v230
    %261 = vmatpush.msra.mxu0 %v229
    %262 = vmatpush.msra.mxu0 %v228
    %263 = vmatpush.msra.mxu0 %v227
    %264 = vmatpush.msra.mxu0 %v226
    %265 = vmatpush.msra.mxu0 %v225
    %266 = vmatmul.f32.gmra.mxu0 %v239
    %v267 = vpop.f32.mrf.mxu0
    %v268 = vadd.f32 %v235, %v267
    %269 = vmatmul.f32.gmra.mxu0 %v242
    %v270 = vpop.f32.mrf.mxu0
    %v271 = vadd.f32 %v235, %v270
    %272 = vmatmul.f32.gmra.mxu0 %v245
    %v273 = vpop.f32.mrf.mxu0
    %v274 = vadd.f32 %v235, %v273
    %275 = vmatmul.f32.gmra.mxu0 %v248
    %v276 = vpop.f32.mrf.mxu0
    %v277 = vadd.f32 %v235, %v276
    %278 = vdwg.mxu0
    %v280 = vsel %vm237, %v268, 0
    %v283 = vsel %vm237, %v271, 0
    %285 = vmatpush.xpose.msra.mxu0 0.0
    %286 = vmatpush.xpose.msra.mxu0 0.0
    %287 = vmatpush.xpose.msra.mxu0 0.0
    %288 = vmatpush.xpose.msra.mxu0 0.0
    %289 = vmatpush.xpose.msra.mxu0 0.0
    %290 = vmatpush.xpose.msra.mxu0 0.0
    %291 = vmatpush.xpose.msra.mxu0 0.0
    %292 = vmatpush.xpose.msra.mxu0 0.0
    %293 = vmatpush.xpose.msra.mxu0 0.0
    %294 = vmatpush.xpose.msra.mxu0 0.0
    %295 = vmatpush.xpose.msra.mxu0 0.0
    %296 = vmatpush.xpose.msra.mxu0 0.0
    %297 = vmatpush.xpose.msra.mxu0 0.0
    %298 = vmatpush.xpose.msra.mxu0 0.0
    %299 = vmatpush.xpose.msra.mxu0 %v283
    %300 = vmatpush.xpose.msra.mxu0 %v280
    %301 = vmatmul.f32.gmra.mxu0 %v280
    %v302 = vpop.f32.mrf.mxu0
    %v303 = vadd.f32 0.0, %v302
    %304 = vmatmul.f32.gmra.mxu0 %v283
    %v305 = vpop.f32.mrf.mxu0
    %v306 = vadd.f32 0.0, %v305
    %307 = vdwg.mxu0
    %v309 = vsel %vm237, %v274, 0
    %v312 = vsel %vm237, %v277, 0
    %314 = vmatpush.xpose.msra.mxu0 0.0
    %315 = vmatpush.xpose.msra.mxu0 0.0
    %316 = vmatpush.xpose.msra.mxu0 0.0
    %317 = vmatpush.xpose.msra.mxu0 0.0
    %318 = vmatpush.xpose.msra.mxu0 0.0
    %319 = vmatpush.xpose.msra.mxu0 0.0
    %320 = vmatpush.xpose.msra.mxu0 0.0
    %321 = vmatpush.xpose.msra.mxu0 0.0
    %322 = vmatpush.xpose.msra.mxu0 0.0
    %323 = vmatpush.xpose.msra.mxu0 0.0
    %324 = vmatpush.xpose.msra.mxu0 0.0
    %325 = vmatpush.xpose.msra.mxu0 0.0
    %326 = vmatpush.xpose.msra.mxu0 0.0
    %327 = vmatpush.xpose.msra.mxu0 0.0
    %328 = vmatpush.xpose.msra.mxu0 %v312
    %329 = vmatpush.xpose.msra.mxu0 %v309
    %330 = vmatmul.f32.gmra.mxu0 %v309
    %v331 = vpop.f32.mrf.mxu0
    %v332 = vadd.f32 0.0, %v331
    %333 = vmatmul.f32.gmra.mxu0 %v312
    %v334 = vpop.f32.mrf.mxu0
    %v335 = vadd.f32 0.0, %v334
    %336 = vdwg.mxu0
    %v337 = vmax.f32 %v303, 0.0
    %v338 = vmax.f32 %v306, 0.0
    %v339 = vmax.f32 %v332, 0.0
    %v340 = vmax.f32 %v335, 0.0
    %vm341 = vcmask 130048
    %v342 = vsel %vm341, %v337, 0.0
    %343 = vadd.xlane.f32.xlu0 %v342
    %v344 = vpop.xlane.xlu0 %343
    %v345 = vsel %vm341, %v338, 0.0
    %346 = vadd.xlane.f32.xlu0 %v345
    %v347 = vpop.xlane.xlu0 %346
    %v348 = vsel %vm341, %v339, 0.0
    %349 = vadd.xlane.f32.xlu0 %v348
    %v350 = vpop.xlane.xlu0 %349
    %v351 = vsel %vm341, %v340, 0.0
    %352 = vadd.xlane.f32.xlu0 %v351
    %v353 = vpop.xlane.xlu0 %352
    %v354 = vadd.f32 %v344, 1e-06
    %v355 = vadd.f32 %v347, 1e-06
    %v356 = vadd.f32 %v350, 1e-06
    %v357 = vadd.f32 %v353, 1e-06
    %v358 = vrcp.pop %v354
    %v359 = vrcp.pop %v355
    %v360 = vrcp.pop %v356
    %v361 = vrcp.pop %v357
    %v362 = vmul.f32 %v354, %v358
    %v363 = vmul.f32 %v355, %v359
    %v364 = vmul.f32 %v356, %v360
    %v365 = vmul.f32 %v357, %v361
    %v366 = vsub.f32 2.0, %v362
    %v367 = vsub.f32 2.0, %v363
    %v368 = vsub.f32 2.0, %v364
    %v369 = vsub.f32 2.0, %v365
    %v370 = vmul.f32 %v358, %v366
    %v371 = vmul.f32 %v359, %v367
    %v372 = vmul.f32 %v360, %v368
    %v373 = vmul.f32 %v361, %v369
    %v374 = vmul.f32 %v337, %v370
    %v375 = vmul.f32 %v338, %v371
    %v376 = vmul.f32 %v339, %v372
    %v377 = vmul.f32 %v340, %v373
    %378 = vst.msk [vmem:[#allocation8] sm:$0xff] %vm341, %v374
    %379 = vst.msk [vmem:[#allocation8 + $0x8] sm:$0xff] %vm341, %v375
    %380 = vst.msk [vmem:[#allocation8 + $0x10] sm:$0xff] %vm341, %v376
    %381 = vst.msk [vmem:[#allocation8 + $0x18] sm:$0xff] %vm341, %v377
    // Predicated region
    $region34: #{tpu_custom_call.1} parent=1 // pred_check
      _
    $region35: #{tpu_custom_call.1} parent=1 // pred_check_branch
      %383 = sbr.rel (0) target = $region37
    $region36: #{tpu_custom_call.1} parent=1 // pred_region
      %385 = vsyncadd [#allocation4], 0
      %s386 = sshll.u32 [#allocation8], 4
      %s387 = int_to_ptr.vmem [resolvable:$true] %s386
      %s388 = sshll.u32 %s5, 4
      %s389 = int_to_ptr.hbm [resolvable:$true] %s388
      %394 = dma.vmem_to_hbm [thread:$0]  %s387, 512, %s389, [#allocation4], 128, 128, 8
    $region37: #{tpu_custom_call.1} parent=1 // pred_fallthru
      _
    // Predicated region
    $region38: #{tpu_custom_call.1} parent=1 // pred_check
      _
    $region39: #{tpu_custom_call.1} parent=1 // pred_check_branch
      %396 = sbr.rel (0) target = $region41
    $region40: #{tpu_custom_call.1} parent=1 // pred_region
      %398 = dma.done [#allocation4], 512
    $region41: #{tpu_custom_call.1} parent=1 // pred_fallthru
      _
    %399 = vsyncpa [#allocation3], 1
    %400 = vsyncpa [#allocation6], 1
    %401 = vsyncpa [#allocation4], 1

</llo_original>
